<compile_context>
chip_gen: v7x
topology: tpu7x:2x2x1
jax: 0.10.0
libtpu: 0.0.40
codegen_flags: <defaults>
</compile_context>

<pallas_src>
import functools

import jax
import jax.numpy as jnp
from jax.experimental import pallas as pl
from jax.experimental.pallas import tpu as pltpu


# ----------------------------------------------------------------------------
# Kernel bodies.
#   x_ref     : (Bt, tk)   f32  (cast to bf16 in-register before the MXU)
#   w_ref     : (tk, P*F)  bf16 (lane-dense weight slab tile, col = p*F + f)
#   scale_ref : (1, F)     f32
#   bias_ref  : (1, F)     f32
#   out_ref   : (Bt, F)    f32
#   acc_ref   : (Bt, P*F)  f32 VMEM scratch (multi-K variant only)
# ----------------------------------------------------------------------------
def _epilogue(scores, scale, bias, *, n_samples, out_dim, rescale, add_bias,
              out_dtype):
    # max over samples p: unrolled static lane slices + jnp.maximum.
    m = scores[:, 0:out_dim]
    for p in range(1, n_samples):
        m = jnp.maximum(m, scores[:, p * out_dim:(p + 1) * out_dim])
    if rescale:
        m = m * scale                       # (1, F) broadcasts over (Bt, F)
    if add_bias:
        m = m + bias
    # act = nn.Identity() (module default act=None)
    return m.astype(out_dtype)


def _affine_kernel_single_k(x_ref, w_ref, scale_ref, bias_ref, out_ref, *,
                            n_samples, out_dim, rescale, add_bias):
    # nk == 1 specialization: no accumulator scratch, no pl.when ladder.
    x = x_ref[...].astype(jnp.bfloat16)     # in-register f32 -> bf16 cast
    s = jnp.dot(x, w_ref[...], preferred_element_type=jnp.float32)
    out_ref[...] = _epilogue(s, scale_ref[...], bias_ref[...],
                             n_samples=n_samples, out_dim=out_dim,
                             rescale=rescale, add_bias=add_bias,
                             out_dtype=out_ref.dtype)


def _affine_kernel_multi_k(x_ref, w_ref, scale_ref, bias_ref, out_ref, acc_ref,
                           *, n_samples, out_dim, rescale, add_bias):
    k = pl.program_id(1)                    # K (=I) reduction axis (innermost)
    x = x_ref[...].astype(jnp.bfloat16)
    s = jnp.dot(x, w_ref[...], preferred_element_type=jnp.float32)

    @pl.when(k == 0)
    def _():
        acc_ref[...] = s

    @pl.when(k > 0)
    def _():
        acc_ref[...] = acc_ref[...] + s

    @pl.when(k == pl.num_programs(1) - 1)
    def _():
        out_ref[...] = _epilogue(acc_ref[...], scale_ref[...], bias_ref[...],
                                 n_samples=n_samples, out_dim=out_dim,
                                 rescale=rescale, add_bias=add_bias,
                                 out_dtype=out_ref.dtype)


# ----------------------------------------------------------------------------
# Per-generation tile selection (v5e/v6e: 128 MiB VMEM, v7x: 64 MiB per TC).
# ----------------------------------------------------------------------------
def _choose_tiles(B, I, PF, F_):
    try:
        vmem_cap = int(pltpu.get_tpu_info().vmem_capacity_bytes)
    except Exception:
        vmem_cap = 64 * 1024 * 1024          # conservative (v7x per-TC) fallback
    budget = int(vmem_cap * 0.45)            # working-set target, leaves headroom

    # Batch tile: the f32 (Bt, P*F) accumulator is the scaling hazard on v7x's
    # 64 MiB VMEM -> keep it under ~1/3 of the budget.
    Bt = 16
    for cand in (512, 256, 128, 64, 32, 16):
        if cand * PF * 4 <= budget // 3:
            Bt = cand
            break

    # Pad batch to a multiple of 16: one bf16 vreg packs [16, 128] sublanes.
    Bp = max(16, ((B + 15) // 16) * 16)
    if Bp <= Bt:
        Bt = Bp                              # single batch block
    else:
        Bp = ((Bp + Bt - 1) // Bt) * Bt      # multiple of the batch tile

    # K (=I) tile: double-buffered bf16 weight tile + f32 x tile fit the rest.
    rem = budget - Bt * PF * 4 - 2 * Bt * F_ * 4
    per_k = 2 * PF * 2 + 2 * Bt * 4          # bytes of VMEM per unit of tk
    if I * per_k <= rem:
        tk = I                               # single K step (common case)
    else:
        tk = 128
        for cand in (4096, 2048, 1024, 512, 256, 128):
            if cand * per_k <= rem:
                tk = cand
                break
    Ip = ((I + tk - 1) // tk) * tk           # pad I instead of a risky fallback
    return Bt, Bp, tk, Ip, vmem_cap


def affine_layer_forward(x_flat, w_slab, scale, bias, *,
                         n_samples, out_dim, rescale=True, add_bias=True):
    """x_flat: (B, I) f32; w_slab: (I, P*F) bf16 (col = p*F + f);
       scale/bias: (1, F) f32. Returns (B, F) f32."""
    B, I = x_flat.shape
    I2, PF = w_slab.shape
    assert I == I2 and PF == n_samples * out_dim

    Bt, Bp, tk, Ip, vmem_cap = _choose_tiles(B, I, PF, out_dim)

    # Zero-pad batch rows (sliced off afterwards) and, if the K tile does not
    # divide I, zero-pad the contraction dim on both operands (contributes 0).
    # For production the I-padding belongs in prepare_weight_slab (prep time).
    if Bp != B:
        x_flat = jnp.pad(x_flat, ((0, Bp - B), (0, 0)))
    if Ip != I:
        x_flat = jnp.pad(x_flat, ((0, 0), (0, Ip - I)))
        w_slab = jnp.pad(w_slab, ((0, Ip - I), (0, 0)))

    nb = Bp // Bt
    nk = Ip // tk

    common = dict(n_samples=n_samples, out_dim=out_dim,
                  rescale=rescale, add_bias=add_bias)
    if nk == 1:
        kernel = functools.partial(_affine_kernel_single_k, **common)
        scratch = []
    else:
        kernel = functools.partial(_affine_kernel_multi_k, **common)
        scratch = [pltpu.VMEM((Bt, PF), jnp.float32)]

    # TODO(synk): if nk is large in production, sweep pipeline_mode=
    # pl.Buffered(3) on the weight-slab BlockSpec, and consider int8 (v5e/v6e)
    # or fp8 (v7x) slabs to halve the dominant weight HBM traffic.
    out = pl.pallas_call(
        kernel,
        out_shape=jax.ShapeDtypeStruct((Bp, out_dim), jnp.float32),
        grid_spec=pltpu.PrefetchScalarGridSpec(
            num_scalar_prefetch=0,
            grid=(nb, nk),                                      # (batch, K)
            in_specs=[
                pl.BlockSpec((Bt, tk), lambda b, k: (b, k)),     # x (f32)
                pl.BlockSpec((tk, PF), lambda b, k: (k, 0)),     # weight slab
                pl.BlockSpec((1, out_dim), lambda b, k: (0, 0)),  # scale
                pl.BlockSpec((1, out_dim), lambda b, k: (0, 0)),  # bias
            ],
            out_specs=pl.BlockSpec((Bt, out_dim), lambda b, k: (b, 0)),
            scratch_shapes=scratch,
        ),
        compiler_params=pltpu.CompilerParams(
            dimension_semantics=("parallel", "arbitrary"),
            vmem_limit_bytes=int(vmem_cap * 0.75),
        ),
    )(x_flat, w_slab, scale, bias)
    return out[:B]


# ----------------------------------------------------------------------------
# Parameter setup / glue (plain JAX, runs once at weight-prep time).
# ----------------------------------------------------------------------------
def kaiming_uniform(key, shape, a=2.2236):
    fan_in = shape[1]
    bound = jnp.sqrt(6.0 / ((1.0 + a * a) * fan_in))
    return jax.random.uniform(key, shape, jnp.float32, -bound, bound)


def get_features(features, feature_shape, inp_shape):
    # features: (out_dim, feature_dim) -> unflatten -> F.pad (spatial, centered)
    F_, _ = features.shape
    ff = features.reshape((F_,) + tuple(feature_shape))
    pad_h = (inp_shape[1] - feature_shape[1]) // 2
    pad_w = (inp_shape[2] - feature_shape[2]) // 2
    return jnp.pad(ff, ((0, 0), (0, 0), (pad_h, pad_h), (pad_w, pad_w)))


def shift_sampler(ff, n_samples):
    # Deterministic synthetic sampler: n_samples spatial shifts of the padded
    # features.  Output shape (out_dim, n_samples, C, H, W).
    # TODO(synk): the true `sampler` module is not defined in the source file.
    shifts = [(p % 3 - 1, p // 3 - 1) for p in range(n_samples)]
    stacks = [jnp.roll(ff, shift=s, axis=(2, 3)) for s in shifts]
    return jnp.stack(stacks, axis=1)


def prepare_weight_slab(features, feature_shape, inp_shape, n_samples):
    """get_weight() equivalent, done once: pad features, run sampler, and lay
    the sampled weights out as a contiguous lane-dense bf16 slab (I, P*F)."""
    ff = get_features(features, feature_shape, inp_shape)      # (F, C, H, W)
    ww = shift_sampler(ff, n_samples)                           # (F, P, C, H, W)
    F_, P = ww.shape[0], ww.shape[1]
    I = ww.shape[2] * ww.shape[3] * ww.shape[4]
    ww_fpi = ww.reshape(F_, P, I)                               # (F, P, I) f32
    # (F, P, I) -> (I, P, F) -> (I, P*F); column index = p*F + f.
    slab = jnp.transpose(ww_fpi, (2, 1, 0)).reshape(I, P * F_)
    return slab.astype(jnp.bfloat16), ww_fpi


if __name__ == "__main__":
    # Small, module-consistent shapes.
    B = 2
    inp_shape = (4, 16, 16)       # (C, H, W)
    feature_shape = (4, 8, 8)
    out_dim = 32                  # F
    n_samples = 8                 # P
    inp_dim = inp_shape[0] * inp_shape[1] * inp_shape[2]        # I = 1024
    feature_dim = feature_shape[0] * feature_shape[1] * feature_shape[2]

    key = jax.random.PRNGKey(0)
    kx, kf = jax.random.split(key)

    # Input (NCHW) and parameters (deterministic init, as in __init__).
    x = jax.random.normal(kx, (B,) + inp_shape, jnp.float32)
    features = kaiming_uniform(kf, (out_dim, feature_dim))      # init_weights
    bias = jnp.zeros((1, out_dim), jnp.float32)                 # nn.Parameter zeros
    scale = jnp.ones((1, out_dim), jnp.float32)                 # nn.Parameter ones

    # Weight prep (once): padded features -> sampler -> lane-dense bf16 slab.
    w_slab, ww_fpi = prepare_weight_slab(features, feature_shape,
                                         inp_shape, n_samples)  # (I, P*F) bf16

    # forward(): x.flatten(1)
    x_flat = x.reshape(B, inp_dim)                              # (B, I)

    out = affine_layer_forward(x_flat, w_slab, scale, bias,
                               n_samples=n_samples, out_dim=out_dim,
                               rescale=True, add_bias=True)
    out = jax.block_until_ready(out)

    # Pure-JAX reference of einsum + max + scale/bias, with the same bf16
    # rounding of the matmul inputs (accumulation stays f32).
    x_r = x_flat.astype(jnp.bfloat16).astype(jnp.float32)
    w_r = ww_fpi.astype(jnp.bfloat16).astype(jnp.float32)
    scores_ref = jnp.einsum('bi,fpi->bpf', x_r, w_r)
    ref = jnp.max(scores_ref, axis=1) * scale + bias
    assert out.shape == (B, out_dim)
    assert jnp.allclose(out, ref, atol=1e-2, rtol=1e-2), "mismatch vs reference"

    # TODO(synk): with_features=True branch (argmax-indexed feature gather) is
    # not implemented in the kernel; only the default forward path is covered.
    print("KERNEL_OK")
</pallas_src>

<mosaic_0001>
module attributes {stable_mosaic.version = 11 : i64} {
  func.func @_affine_kernel_single_k(%arg0: i32, %arg1: i32, %arg2: memref<16x1024xf32, #tpu.memory_space<vmem>>, %arg3: memref<1024x256xbf16, #tpu.memory_space<vmem>>, %arg4: memref<1x32xf32, #tpu.memory_space<vmem>>, %arg5: memref<1x32xf32, #tpu.memory_space<vmem>>, %arg6: memref<16x32xf32, #tpu.memory_space<vmem>>) attributes {dimension_semantics = [#tpu.dimension_semantics<parallel>, #tpu.dimension_semantics<arbitrary>], iteration_bounds = array<i64: 1, 1>, scalar_prefetch = 0 : i64, scratch_operands = 0 : i64, tpu.core_type = #tpu.core_type<tc>, window_params = [{transform_indices = @transform_0, window_bounds = array<i64: 16, 1024>}, {transform_indices = @transform_1, window_bounds = array<i64: 1024, 256>}, {pipeline_mode = #tpu.pipeline_mode<synchronous>, transform_indices = @transform_2, window_bounds = array<i64: 1, 32>}, {pipeline_mode = #tpu.pipeline_mode<synchronous>, transform_indices = @transform_3, window_bounds = array<i64: 1, 32>}, {transform_indices = @transform_4, window_bounds = array<i64: 16, 32>}]} {
    %c0 = arith.constant 0 : index
    %c0_0 = arith.constant 0 : index
    %0 = vector.load %arg2[%c0, %c0_0] : memref<16x1024xf32, #tpu.memory_space<vmem>>, vector<16x1024xf32>
    %1 = arith.truncf %0 : vector<16x1024xf32> to vector<16x1024xbf16>
    %c0_1 = arith.constant 0 : index
    %c0_2 = arith.constant 0 : index
    %2 = vector.load %arg3[%c0_1, %c0_2] : memref<1024x256xbf16, #tpu.memory_space<vmem>>, vector<1024x256xbf16>
    %cst = arith.constant dense<0.000000e+00> : vector<16x256xf32>
    %3 = tpu.matmul %1, %2, %cst {dimension_numbers = #tpu.dot_dimension_numbers<[1], [0], [0], [1], [0, 0, 1, 1], [], []>} : vector<16x1024xbf16>, vector<1024x256xbf16>, vector<16x256xf32> -> vector<16x256xf32>
    %c0_3 = arith.constant 0 : index
    %c0_4 = arith.constant 0 : index
    %4 = vector.load %arg4[%c0_3, %c0_4] : memref<1x32xf32, #tpu.memory_space<vmem>>, vector<1x32xf32>
    %c0_5 = arith.constant 0 : index
    %c0_6 = arith.constant 0 : index
    %5 = vector.load %arg5[%c0_5, %c0_6] : memref<1x32xf32, #tpu.memory_space<vmem>>, vector<1x32xf32>
    %6 = vector.extract_strided_slice %3 {offsets = [0, 0], sizes = [16, 32], strides = [1, 1]} : vector<16x256xf32> to vector<16x32xf32>
    %7 = vector.extract_strided_slice %3 {offsets = [0, 32], sizes = [16, 32], strides = [1, 1]} : vector<16x256xf32> to vector<16x32xf32>
    %8 = arith.maximumf %6, %7 : vector<16x32xf32>
    %9 = vector.extract_strided_slice %3 {offsets = [0, 64], sizes = [16, 32], strides = [1, 1]} : vector<16x256xf32> to vector<16x32xf32>
    %10 = arith.maximumf %8, %9 : vector<16x32xf32>
    %11 = vector.extract_strided_slice %3 {offsets = [0, 96], sizes = [16, 32], strides = [1, 1]} : vector<16x256xf32> to vector<16x32xf32>
    %12 = arith.maximumf %10, %11 : vector<16x32xf32>
    %13 = vector.extract_strided_slice %3 {offsets = [0, 128], sizes = [16, 32], strides = [1, 1]} : vector<16x256xf32> to vector<16x32xf32>
    %14 = arith.maximumf %12, %13 : vector<16x32xf32>
    %15 = vector.extract_strided_slice %3 {offsets = [0, 160], sizes = [16, 32], strides = [1, 1]} : vector<16x256xf32> to vector<16x32xf32>
    %16 = arith.maximumf %14, %15 : vector<16x32xf32>
    %17 = vector.extract_strided_slice %3 {offsets = [0, 192], sizes = [16, 32], strides = [1, 1]} : vector<16x256xf32> to vector<16x32xf32>
    %18 = arith.maximumf %16, %17 : vector<16x32xf32>
    %19 = vector.extract_strided_slice %3 {offsets = [0, 224], sizes = [16, 32], strides = [1, 1]} : vector<16x256xf32> to vector<16x32xf32>
    %20 = arith.maximumf %18, %19 : vector<16x32xf32>
    %21 = vector.broadcast %4 : vector<1x32xf32> to vector<16x32xf32>
    %22 = arith.mulf %20, %21 : vector<16x32xf32>
    %23 = vector.broadcast %5 : vector<1x32xf32> to vector<16x32xf32>
    %24 = arith.addf %22, %23 : vector<16x32xf32>
    %c0_7 = arith.constant 0 : index
    %c0_8 = arith.constant 0 : index
    %25 = vector.load %arg6[%c0_7, %c0_8] : memref<16x32xf32, #tpu.memory_space<vmem>>, vector<16x32xf32>
    tpu.vector_store %arg6[%c0_7, %c0_8], %24 {strides = array<i32>} : memref<16x32xf32, #tpu.memory_space<vmem>>, vector<16x32xf32>,
    return
  }
  func.func @transform_0(%arg0: i32, %arg1: i32) -> (i32, i32) {
    %c0_i32 = arith.constant 0 : i32
    return %arg0, %arg1 : i32, i32
  }
  func.func @transform_1(%arg0: i32, %arg1: i32) -> (i32, i32) {
    %c0_i32 = arith.constant 0 : i32
    %c0_i32_0 = arith.constant 0 : i32
    return %arg1, %c0_i32 : i32, i32
  }
  func.func @transform_2(%arg0: i32, %arg1: i32) -> (i32, i32) {
    %c0_i32 = arith.constant 0 : i32
    %c0_i32_0 = arith.constant 0 : i32
    %c0_i32_1 = arith.constant 0 : i32
    return %c0_i32, %c0_i32_0 : i32, i32
  }
  func.func @transform_3(%arg0: i32, %arg1: i32) -> (i32, i32) {
    %c0_i32 = arith.constant 0 : i32
    %c0_i32_0 = arith.constant 0 : i32
    %c0_i32_1 = arith.constant 0 : i32
    return %c0_i32, %c0_i32_0 : i32, i32
  }
  func.func @transform_4(%arg0: i32, %arg1: i32) -> (i32, i32) {
    %c0_i32 = arith.constant 0 : i32
    %c0_i32_0 = arith.constant 0 : i32
    return %arg0, %c0_i32 : i32, i32
  }
}

</mosaic_0001>

<llo_original>
// kernel: tpu_custom_call.1
$region0: #{tpu_custom_call.1}
  #allocation0 [shape = 'u32[]', space=smem, size = 0x4, offset = 0x4, fixed_abs, tag = 'smem constant byte address 0x4 - core index']
  #allocation1 [shape = 'u32[144,128]{1,0:T(1,128)}', space=vmem, size = 0x12000, scoped, tag = 'internal scratch']
  %s0 = inlined_call_operand.hbm [shape: f32[16,1024], index: 0, kind: input, shape index: {}]
  %s1 = inlined_call_operand.hbm [shape: bf16[1024,256], index: 1, kind: input, shape index: {}]
  %s2 = inlined_call_operand.vmem [shape: f32[1,32], index: 2, kind: input, shape index: {}]
  %s3 = inlined_call_operand.vmem [shape: f32[1,32], index: 3, kind: input, shape index: {}]
  %s4 = inlined_call_operand.hbm [shape: f32[16,32], index: 4, kind: output, shape index: {}]
  %s5 = sld [smem:[#allocation0]]
  $region34: #{tpu_custom_call.1} parent=0
    _
  %s7 = ssub.s32 1, %s5
  %s8 = scalar_select 0, %s7, %s5
  $region1: #{tpu_custom_call.1} parent=0
    #allocation2 [shape = 'u8[65536]{0}', space=vmem, size = 0x10000, scoped, tag = 'input window, operand 0, single buffered']
    #allocation3 [shape = 's32[1]{0}', space=sflag, size = 0x4, scoped, tag = 'scoped memory for tpu_custom_call.1']
    #allocation4 [shape = 's32[1]{0}', space=sflag, size = 0x4, scoped, tag = 'scoped memory for tpu_custom_call.1']
    #allocation5 [shape = 'u8[524288]{0}', space=vmem, size = 0x80000, scoped, tag = 'input window, operand 1, single buffered']
    #allocation6 [shape = 's32[1]{0}', space=sflag, size = 0x4, scoped, tag = 'scoped memory for tpu_custom_call.1']
    #allocation7 [shape = 'u8[8192]{0}', space=vmem, size = 0x2000, scoped, tag = 'output window, operand 0, single buffered']
    %9 = vsyncpa [#allocation3], 0
    %10 = vsyncpa [#allocation6], 0
    %11 = vsyncpa [#allocation4], 0
    // Predicated region
    $region2: #{tpu_custom_call.1} parent=1 // pred_check
      _
    $region3: #{tpu_custom_call.1} parent=1 // pred_check_branch
      %13 = sbr.rel (0) target = $region5
    $region4: #{tpu_custom_call.1} parent=1 // pred_region
      %s15 = ssub.s32 2048, 2048
      %16 = vsyncadd [#allocation3], %s15
      %s17 = sshll.u32 [#allocation2], 4
      %s18 = int_to_ptr.vmem [resolvable:$true] %s17
      %23 = dma.hbm_to_vmem [thread:$0]  %s0, 2048, %s18, [#allocation3], 1024, 1024, 64
    $region5: #{tpu_custom_call.1} parent=1 // pred_fallthru
      _
    // Predicated region
    $region6: #{tpu_custom_call.1} parent=1 // pred_check
      _
    $region7: #{tpu_custom_call.1} parent=1 // pred_check_branch
      %25 = sbr.rel (0) target = $region9
    $region8: #{tpu_custom_call.1} parent=1 // pred_region
      %s27 = ssub.s32 16384, 16384
      %28 = vsyncadd [#allocation6], %s27
      %s29 = sshll.u32 [#allocation5], 4
      %s30 = int_to_ptr.vmem [resolvable:$true] %s29
      %35 = dma.hbm_to_vmem [thread:$0]  %s1, 16384, %s30, [#allocation6], 128, 128, 8
    $region9: #{tpu_custom_call.1} parent=1 // pred_fallthru
      _
    // Predicated region
    $region10: #{tpu_custom_call.1} parent=1 // pred_check
      _
    $region11: #{tpu_custom_call.1} parent=1 // pred_check_branch
      %37 = sbr.rel (0) target = $region13
    $region12: #{tpu_custom_call.1} parent=1 // pred_region
      _
    $region13: #{tpu_custom_call.1} parent=1 // pred_fallthru
      _
    // Predicated region
    $region14: #{tpu_custom_call.1} parent=1 // pred_check
      _
    $region15: #{tpu_custom_call.1} parent=1 // pred_check_branch
      %39 = sbr.rel (0) target = $region17
    $region16: #{tpu_custom_call.1} parent=1 // pred_region
      _
    $region17: #{tpu_custom_call.1} parent=1 // pred_fallthru
      _
    // Predicated region
    $region18: #{tpu_custom_call.1} parent=1 // pred_check
      _
    $region19: #{tpu_custom_call.1} parent=1 // pred_check_branch
      %41 = sbr.rel (0) target = $region21
    $region20: #{tpu_custom_call.1} parent=1 // pred_region
      %42 = dma.done [#allocation3], 2048
    $region21: #{tpu_custom_call.1} parent=1 // pred_fallthru
      _
    // Predicated region
    $region22: #{tpu_custom_call.1} parent=1 // pred_check
      _
    $region23: #{tpu_custom_call.1} parent=1 // pred_check_branch
      %44 = sbr.rel (0) target = $region25
    $region24: #{tpu_custom_call.1} parent=1 // pred_region
      %45 = dma.done [#allocation6], 16384
    $region25: #{tpu_custom_call.1} parent=1 // pred_fallthru
      _
    %v46 = vld [vmem:[#allocation2] sm:$0xff]
    %v47 = vld [vmem:[#allocation2 + $0x8] sm:$0xff]
    %v48 = vld [vmem:[#allocation2 + $0x10] sm:$0xff]
    %v49 = vld [vmem:[#allocation2 + $0x18] sm:$0xff]
    %v50 = vld [vmem:[#allocation2 + $0x20] sm:$0xff]
    %v51 = vld [vmem:[#allocation2 + $0x28] sm:$0xff]
    %v52 = vld [vmem:[#allocation2 + $0x30] sm:$0xff]
    %v53 = vld [vmem:[#allocation2 + $0x38] sm:$0xff]
    %v54 = vld [vmem:[#allocation2 + $0x40] sm:$0xff]
    %v55 = vld [vmem:[#allocation2 + $0x48] sm:$0xff]
    %v56 = vld [vmem:[#allocation2 + $0x50] sm:$0xff]
    %v57 = vld [vmem:[#allocation2 + $0x58] sm:$0xff]
    %v58 = vld [vmem:[#allocation2 + $0x60] sm:$0xff]
    %v59 = vld [vmem:[#allocation2 + $0x68] sm:$0xff]
    %v60 = vld [vmem:[#allocation2 + $0x70] sm:$0xff]
    %v61 = vld [vmem:[#allocation2 + $0x78] sm:$0xff]
    %v62 = vpack.c.bf16 %v54, %v46
    %v63 = vpack.c.bf16 %v55, %v47
    %v64 = vpack.c.bf16 %v56, %v48
    %v65 = vpack.c.bf16 %v57, %v49
    %v66 = vpack.c.bf16 %v58, %v50
    %v67 = vpack.c.bf16 %v59, %v51
    %v68 = vpack.c.bf16 %v60, %v52
    %v69 = vpack.c.bf16 %v61, %v53
    %v70 = vld [vmem:[#allocation5] sm:$0xff]
    %v71 = vld [vmem:[#allocation5 + $0x8] sm:$0xff]
    %v72 = vld [vmem:[#allocation5 + $0x10] sm:$0xff]
    %v73 = vld [vmem:[#allocation5 + $0x18] sm:$0xff]
    %v74 = vld [vmem:[#allocation5 + $0x20] sm:$0xff]
    %v75 = vld [vmem:[#allocation5 + $0x28] sm:$0xff]
    %v76 = vld [vmem:[#allocation5 + $0x30] sm:$0xff]
    %v77 = vld [vmem:[#allocation5 + $0x38] sm:$0xff]
    %v78 = vld [vmem:[#allocation5 + $0x40] sm:$0xff]
    %v79 = vld [vmem:[#allocation5 + $0x48] sm:$0xff]
    %v80 = vld [vmem:[#allocation5 + $0x50] sm:$0xff]
    %v81 = vld [vmem:[#allocation5 + $0x58] sm:$0xff]
    %v82 = vld [vmem:[#allocation5 + $0x60] sm:$0xff]
    %v83 = vld [vmem:[#allocation5 + $0x68] sm:$0xff]
    %v84 = vld [vmem:[#allocation5 + $0x70] sm:$0xff]
    %v85 = vld [vmem:[#allocation5 + $0x78] sm:$0xff]
    %v86 = vld [vmem:[#allocation5 + $0x80] sm:$0xff]
    %v87 = vld [vmem:[#allocation5 + $0x88] sm:$0xff]
    %v88 = vld [vmem:[#allocation5 + $0x90] sm:$0xff]
    %v89 = vld [vmem:[#allocation5 + $0x98] sm:$0xff]
    %v90 = vld [vmem:[#allocation5 + $0xa0] sm:$0xff]
    %v91 = vld [vmem:[#allocation5 + $0xa8] sm:$0xff]
    %v92 = vld [vmem:[#allocation5 + $0xb0] sm:$0xff]
    %v93 = vld [vmem:[#allocation5 + $0xb8] sm:$0xff]
    %v94 = vld [vmem:[#allocation5 + $0xc0] sm:$0xff]
    %v95 = vld [vmem:[#allocation5 + $0xc8] sm:$0xff]
    %v96 = vld [vmem:[#allocation5 + $0xd0] sm:$0xff]
    %v97 = vld [vmem:[#allocation5 + $0xd8] sm:$0xff]
    %v98 = vld [vmem:[#allocation5 + $0xe0] sm:$0xff]
    %v99 = vld [vmem:[#allocation5 + $0xe8] sm:$0xff]
    %v100 = vld [vmem:[#allocation5 + $0xf0] sm:$0xff]
    %v101 = vld [vmem:[#allocation5 + $0xf8] sm:$0xff]
    %v102 = vld [vmem:[#allocation5 + $0x100] sm:$0xff]
    %v103 = vld [vmem:[#allocation5 + $0x108] sm:$0xff]
    %v104 = vld [vmem:[#allocation5 + $0x110] sm:$0xff]
    %v105 = vld [vmem:[#allocation5 + $0x118] sm:$0xff]
    %v106 = vld [vmem:[#allocation5 + $0x120] sm:$0xff]
    %v107 = vld [vmem:[#allocation5 + $0x128] sm:$0xff]
    %v108 = vld [vmem:[#allocation5 + $0x130] sm:$0xff]
    %v109 = vld [vmem:[#allocation5 + $0x138] sm:$0xff]
    %v110 = vld [vmem:[#allocation5 + $0x140] sm:$0xff]
    %v111 = vld [vmem:[#allocation5 + $0x148] sm:$0xff]
    %v112 = vld [vmem:[#allocation5 + $0x150] sm:$0xff]
    %v113 = vld [vmem:[#allocation5 + $0x158] sm:$0xff]
    %v114 = vld [vmem:[#allocation5 + $0x160] sm:$0xff]
    %v115 = vld [vmem:[#allocation5 + $0x168] sm:$0xff]
    %v116 = vld [vmem:[#allocation5 + $0x170] sm:$0xff]
    %v117 = vld [vmem:[#allocation5 + $0x178] sm:$0xff]
    %v118 = vld [vmem:[#allocation5 + $0x180] sm:$0xff]
    %v119 = vld [vmem:[#allocation5 + $0x188] sm:$0xff]
    %v120 = vld [vmem:[#allocation5 + $0x190] sm:$0xff]
    %v121 = vld [vmem:[#allocation5 + $0x198] sm:$0xff]
    %v122 = vld [vmem:[#allocation5 + $0x1a0] sm:$0xff]
    %v123 = vld [vmem:[#allocation5 + $0x1a8] sm:$0xff]
    %v124 = vld [vmem:[#allocation5 + $0x1b0] sm:$0xff]
    %v125 = vld [vmem:[#allocation5 + $0x1b8] sm:$0xff]
    %v126 = vld [vmem:[#allocation5 + $0x1c0] sm:$0xff]
    %v127 = vld [vmem:[#allocation5 + $0x1c8] sm:$0xff]
    %v128 = vld [vmem:[#allocation5 + $0x1d0] sm:$0xff]
    %v129 = vld [vmem:[#allocation5 + $0x1d8] sm:$0xff]
    %v130 = vld [vmem:[#allocation5 + $0x1e0] sm:$0xff]
    %v131 = vld [vmem:[#allocation5 + $0x1e8] sm:$0xff]
    %v132 = vld [vmem:[#allocation5 + $0x1f0] sm:$0xff]
    %v133 = vld [vmem:[#allocation5 + $0x1f8] sm:$0xff]
    %v134 = vld [vmem:[#allocation5 + $0x200] sm:$0xff]
    %v135 = vld [vmem:[#allocation5 + $0x208] sm:$0xff]
    %v136 = vld [vmem:[#allocation5 + $0x210] sm:$0xff]
    %v137 = vld [vmem:[#allocation5 + $0x218] sm:$0xff]
    %v138 = vld [vmem:[#allocation5 + $0x220] sm:$0xff]
    %v139 = vld [vmem:[#allocation5 + $0x228] sm:$0xff]
    %v140 = vld [vmem:[#allocation5 + $0x230] sm:$0xff]
    %v141 = vld [vmem:[#allocation5 + $0x238] sm:$0xff]
    %v142 = vld [vmem:[#allocation5 + $0x240] sm:$0xff]
    %v143 = vld [vmem:[#allocation5 + $0x248] sm:$0xff]
    %v144 = vld [vmem:[#allocation5 + $0x250] sm:$0xff]
    %v145 = vld [vmem:[#allocation5 + $0x258] sm:$0xff]
    %v146 = vld [vmem:[#allocation5 + $0x260] sm:$0xff]
    %v147 = vld [vmem:[#allocation5 + $0x268] sm:$0xff]
    %v148 = vld [vmem:[#allocation5 + $0x270] sm:$0xff]
    %v149 = vld [vmem:[#allocation5 + $0x278] sm:$0xff]
    %v150 = vld [vmem:[#allocation5 + $0x280] sm:$0xff]
    %v151 = vld [vmem:[#allocation5 + $0x288] sm:$0xff]
    %v152 = vld [vmem:[#allocation5 + $0x290] sm:$0xff]
    %v153 = vld [vmem:[#allocation5 + $0x298] sm:$0xff]
    %v154 = vld [vmem:[#allocation5 + $0x2a0] sm:$0xff]
    %v155 = vld [vmem:[#allocation5 + $0x2a8] sm:$0xff]
    %v156 = vld [vmem:[#allocation5 + $0x2b0] sm:$0xff]
    %v157 = vld [vmem:[#allocation5 + $0x2b8] sm:$0xff]
    %v158 = vld [vmem:[#allocation5 + $0x2c0] sm:$0xff]
    %v159 = vld [vmem:[#allocation5 + $0x2c8] sm:$0xff]
    %v160 = vld [vmem:[#allocation5 + $0x2d0] sm:$0xff]
    %v161 = vld [vmem:[#allocation5 + $0x2d8] sm:$0xff]
    %v162 = vld [vmem:[#allocation5 + $0x2e0] sm:$0xff]
    %v163 = vld [vmem:[#allocation5 + $0x2e8] sm:$0xff]
    %v164 = vld [vmem:[#allocation5 + $0x2f0] sm:$0xff]
    %v165 = vld [vmem:[#allocation5 + $0x2f8] sm:$0xff]
    %v166 = vld [vmem:[#allocation5 + $0x300] sm:$0xff]
    %v167 = vld [vmem:[#allocation5 + $0x308] sm:$0xff]
    %v168 = vld [vmem:[#allocation5 + $0x310] sm:$0xff]
    %v169 = vld [vmem:[#allocation5 + $0x318] sm:$0xff]
    %v170 = vld [vmem:[#allocation5 + $0x320] sm:$0xff]
    %v171 = vld [vmem:[#allocation5 + $0x328] sm:$0xff]
    %v172 = vld [vmem:[#allocation5 + $0x330] sm:$0xff]
    %v173 = vld [vmem:[#allocation5 + $0x338] sm:$0xff]
    %v174 = vld [vmem:[#allocation5 + $0x340] sm:$0xff]
    %v175 = vld [vmem:[#allocation5 + $0x348] sm:$0xff]
    %v176 = vld [vmem:[#allocation5 + $0x350] sm:$0xff]
    %v177 = vld [vmem:[#allocation5 + $0x358] sm:$0xff]
    %v178 = vld [vmem:[#allocation5 + $0x360] sm:$0xff]
    %v179 = vld [vmem:[#allocation5 + $0x368] sm:$0xff]
    %v180 = vld [vmem:[#allocation5 + $0x370] sm:$0xff]
    %v181 = vld [vmem:[#allocation5 + $0x378] sm:$0xff]
    %v182 = vld [vmem:[#allocation5 + $0x380] sm:$0xff]
    %v183 = vld [vmem:[#allocation5 + $0x388] sm:$0xff]
    %v184 = vld [vmem:[#allocation5 + $0x390] sm:$0xff]
    %v185 = vld [vmem:[#allocation5 + $0x398] sm:$0xff]
    %v186 = vld [vmem:[#allocation5 + $0x3a0] sm:$0xff]
    %v187 = vld [vmem:[#allocation5 + $0x3a8] sm:$0xff]
    %v188 = vld [vmem:[#allocation5 + $0x3b0] sm:$0xff]
    %v189 = vld [vmem:[#allocation5 + $0x3b8] sm:$0xff]
    %v190 = vld [vmem:[#allocation5 + $0x3c0] sm:$0xff]
    %v191 = vld [vmem:[#allocation5 + $0x3c8] sm:$0xff]
    %v192 = vld [vmem:[#allocation5 + $0x3d0] sm:$0xff]
    %v193 = vld [vmem:[#allocation5 + $0x3d8] sm:$0xff]
    %v194 = vld [vmem:[#allocation5 + $0x3e0] sm:$0xff]
    %v195 = vld [vmem:[#allocation5 + $0x3e8] sm:$0xff]
    %v196 = vld [vmem:[#allocation5 + $0x3f0] sm:$0xff]
    %v197 = vld [vmem:[#allocation5 + $0x3f8] sm:$0xff]
    %v326 = vunpack.c.l.b16 %v70
    %v327 = vunpack.c.h.b16 %v70
    %v328 = vunpack.c.l.b16 %v71
    %v329 = vunpack.c.h.b16 %v71
    %v330 = vunpack.c.l.b16 %v72
    %v331 = vunpack.c.h.b16 %v72
    %v332 = vunpack.c.l.b16 %v73
    %v333 = vunpack.c.h.b16 %v73
    %v334 = vunpack.c.l.b16 %v74
    %v335 = vunpack.c.h.b16 %v74
    %v336 = vunpack.c.l.b16 %v75
    %v337 = vunpack.c.h.b16 %v75
    %v338 = vunpack.c.l.b16 %v76
    %v339 = vunpack.c.h.b16 %v76
    %v340 = vunpack.c.l.b16 %v77
    %v341 = vunpack.c.h.b16 %v77
    %v342 = vunpack.c.l.b16 %v78
    %v343 = vunpack.c.h.b16 %v78
    %v344 = vunpack.c.l.b16 %v79
    %v345 = vunpack.c.h.b16 %v79
    %v346 = vunpack.c.l.b16 %v80
    %v347 = vunpack.c.h.b16 %v80
    %v348 = vunpack.c.l.b16 %v81
    %v349 = vunpack.c.h.b16 %v81
    %v350 = vunpack.c.l.b16 %v82
    %v351 = vunpack.c.h.b16 %v82
    %v352 = vunpack.c.l.b16 %v83
    %v353 = vunpack.c.h.b16 %v83
    %v354 = vunpack.c.l.b16 %v84
    %v355 = vunpack.c.h.b16 %v84
    %v356 = vunpack.c.l.b16 %v85
    %v357 = vunpack.c.h.b16 %v85
    %v358 = vunpack.c.l.b16 %v86
    %v359 = vunpack.c.h.b16 %v86
    %v360 = vunpack.c.l.b16 %v87
    %v361 = vunpack.c.h.b16 %v87
    %v362 = vunpack.c.l.b16 %v88
    %v363 = vunpack.c.h.b16 %v88
    %v364 = vunpack.c.l.b16 %v89
    %v365 = vunpack.c.h.b16 %v89
    %v366 = vunpack.c.l.b16 %v90
    %v367 = vunpack.c.h.b16 %v90
    %v368 = vunpack.c.l.b16 %v91
    %v369 = vunpack.c.h.b16 %v91
    %v370 = vunpack.c.l.b16 %v92
    %v371 = vunpack.c.h.b16 %v92
    %v372 = vunpack.c.l.b16 %v93
    %v373 = vunpack.c.h.b16 %v93
    %v374 = vunpack.c.l.b16 %v94
    %v375 = vunpack.c.h.b16 %v94
    %v376 = vunpack.c.l.b16 %v95
    %v377 = vunpack.c.h.b16 %v95
    %v378 = vunpack.c.l.b16 %v96
    %v379 = vunpack.c.h.b16 %v96
    %v380 = vunpack.c.l.b16 %v97
    %v381 = vunpack.c.h.b16 %v97
    %v382 = vunpack.c.l.b16 %v98
    %v383 = vunpack.c.h.b16 %v98
    %v384 = vunpack.c.l.b16 %v99
    %v385 = vunpack.c.h.b16 %v99
    %v386 = vunpack.c.l.b16 %v100
    %v387 = vunpack.c.h.b16 %v100
    %v388 = vunpack.c.l.b16 %v101
    %v389 = vunpack.c.h.b16 %v101
    %v390 = vunpack.c.l.b16 %v102
    %v391 = vunpack.c.h.b16 %v102
    %v392 = vunpack.c.l.b16 %v103
    %v393 = vunpack.c.h.b16 %v103
    %v394 = vunpack.c.l.b16 %v104
    %v395 = vunpack.c.h.b16 %v104
    %v396 = vunpack.c.l.b16 %v105
    %v397 = vunpack.c.h.b16 %v105
    %v398 = vunpack.c.l.b16 %v106
    %v399 = vunpack.c.h.b16 %v106
    %v400 = vunpack.c.l.b16 %v107
    %v401 = vunpack.c.h.b16 %v107
    %v402 = vunpack.c.l.b16 %v108
    %v403 = vunpack.c.h.b16 %v108
    %v404 = vunpack.c.l.b16 %v109
    %v405 = vunpack.c.h.b16 %v109
    %v406 = vunpack.c.l.b16 %v110
    %v407 = vunpack.c.h.b16 %v110
    %v408 = vunpack.c.l.b16 %v111
    %v409 = vunpack.c.h.b16 %v111
    %v410 = vunpack.c.l.b16 %v112
    %v411 = vunpack.c.h.b16 %v112
    %v412 = vunpack.c.l.b16 %v113
    %v413 = vunpack.c.h.b16 %v113
    %v414 = vunpack.c.l.b16 %v114
    %v415 = vunpack.c.h.b16 %v114
    %v416 = vunpack.c.l.b16 %v115
    %v417 = vunpack.c.h.b16 %v115
    %v418 = vunpack.c.l.b16 %v116
    %v419 = vunpack.c.h.b16 %v116
    %v420 = vunpack.c.l.b16 %v117
    %v421 = vunpack.c.h.b16 %v117
    %v422 = vunpack.c.l.b16 %v118
    %v423 = vunpack.c.h.b16 %v118
    %v424 = vunpack.c.l.b16 %v119
    %v425 = vunpack.c.h.b16 %v119
    %v426 = vunpack.c.l.b16 %v120
    %v427 = vunpack.c.h.b16 %v120
    %v428 = vunpack.c.l.b16 %v121
    %v429 = vunpack.c.h.b16 %v121
    %v430 = vunpack.c.l.b16 %v122
    %v431 = vunpack.c.h.b16 %v122
    %v432 = vunpack.c.l.b16 %v123
    %v433 = vunpack.c.h.b16 %v123
    %v434 = vunpack.c.l.b16 %v124
    %v435 = vunpack.c.h.b16 %v124
    %v436 = vunpack.c.l.b16 %v125
    %v437 = vunpack.c.h.b16 %v125
    %v438 = vunpack.c.l.b16 %v126
    %v439 = vunpack.c.h.b16 %v126
    %v440 = vunpack.c.l.b16 %v127
    %v441 = vunpack.c.h.b16 %v127
    %v442 = vunpack.c.l.b16 %v128
    %v443 = vunpack.c.h.b16 %v128
    %v444 = vunpack.c.l.b16 %v129
    %v445 = vunpack.c.h.b16 %v129
    %v446 = vunpack.c.l.b16 %v130
    %v447 = vunpack.c.h.b16 %v130
    %v448 = vunpack.c.l.b16 %v131
    %v449 = vunpack.c.h.b16 %v131
    %v450 = vunpack.c.l.b16 %v132
    %v451 = vunpack.c.h.b16 %v132
    %v452 = vunpack.c.l.b16 %v133
    %v453 = vunpack.c.h.b16 %v133
    %v454 = vunpack.c.l.b16 %v134
    %v455 = vunpack.c.h.b16 %v134
    %v456 = vunpack.c.l.b16 %v135
    %v457 = vunpack.c.h.b16 %v135
    %v458 = vunpack.c.l.b16 %v136
    %v459 = vunpack.c.h.b16 %v136
    %v460 = vunpack.c.l.b16 %v137
    %v461 = vunpack.c.h.b16 %v137
    %v462 = vunpack.c.l.b16 %v138
    %v463 = vunpack.c.h.b16 %v138
    %v464 = vunpack.c.l.b16 %v139
    %v465 = vunpack.c.h.b16 %v139
    %v466 = vunpack.c.l.b16 %v140
    %v467 = vunpack.c.h.b16 %v140
    %v468 = vunpack.c.l.b16 %v141
    %v469 = vunpack.c.h.b16 %v141
    %v470 = vunpack.c.l.b16 %v142
    %v471 = vunpack.c.h.b16 %v142
    %v472 = vunpack.c.l.b16 %v143
    %v473 = vunpack.c.h.b16 %v143
    %v474 = vunpack.c.l.b16 %v144
    %v475 = vunpack.c.h.b16 %v144
    %v476 = vunpack.c.l.b16 %v145
    %v477 = vunpack.c.h.b16 %v145
    %v478 = vunpack.c.l.b16 %v146
    %v479 = vunpack.c.h.b16 %v146
    %v480 = vunpack.c.l.b16 %v147
    %v481 = vunpack.c.h.b16 %v147
    %v482 = vunpack.c.l.b16 %v148
    %v483 = vunpack.c.h.b16 %v148
    %v484 = vunpack.c.l.b16 %v149
    %v485 = vunpack.c.h.b16 %v149
    %v486 = vunpack.c.l.b16 %v150
    %v487 = vunpack.c.h.b16 %v150
    %v488 = vunpack.c.l.b16 %v151
    %v489 = vunpack.c.h.b16 %v151
    %v490 = vunpack.c.l.b16 %v152
    %v491 = vunpack.c.h.b16 %v152
    %v492 = vunpack.c.l.b16 %v153
    %v493 = vunpack.c.h.b16 %v153
    %v494 = vunpack.c.l.b16 %v154
    %v495 = vunpack.c.h.b16 %v154
    %v496 = vunpack.c.l.b16 %v155
    %v497 = vunpack.c.h.b16 %v155
    %v498 = vunpack.c.l.b16 %v156
    %v499 = vunpack.c.h.b16 %v156
    %v500 = vunpack.c.l.b16 %v157
    %v501 = vunpack.c.h.b16 %v157
    %v502 = vunpack.c.l.b16 %v158
    %v503 = vunpack.c.h.b16 %v158
    %v504 = vunpack.c.l.b16 %v159
    %v505 = vunpack.c.h.b16 %v159
    %v506 = vunpack.c.l.b16 %v160
    %v507 = vunpack.c.h.b16 %v160
    %v508 = vunpack.c.l.b16 %v161
    %v509 = vunpack.c.h.b16 %v161
    %v510 = vunpack.c.l.b16 %v162
    %v511 = vunpack.c.h.b16 %v162
    %v512 = vunpack.c.l.b16 %v163
    %v513 = vunpack.c.h.b16 %v163
    %v514 = vunpack.c.l.b16 %v164
    %v515 = vunpack.c.h.b16 %v164
    %v516 = vunpack.c.l.b16 %v165
    %v517 = vunpack.c.h.b16 %v165
    %v518 = vunpack.c.l.b16 %v166
    %v519 = vunpack.c.h.b16 %v166
    %v520 = vunpack.c.l.b16 %v167
    %v521 = vunpack.c.h.b16 %v167
    %v522 = vunpack.c.l.b16 %v168
    %v523 = vunpack.c.h.b16 %v168
    %v524 = vunpack.c.l.b16 %v169
    %v525 = vunpack.c.h.b16 %v169
    %v526 = vunpack.c.l.b16 %v170
    %v527 = vunpack.c.h.b16 %v170
    %v528 = vunpack.c.l.b16 %v171
    %v529 = vunpack.c.h.b16 %v171
    %v530 = vunpack.c.l.b16 %v172
    %v531 = vunpack.c.h.b16 %v172
    %v532 = vunpack.c.l.b16 %v173
    %v533 = vunpack.c.h.b16 %v173
    %v534 = vunpack.c.l.b16 %v174
    %v535 = vunpack.c.h.b16 %v174
    %v536 = vunpack.c.l.b16 %v175
    %v537 = vunpack.c.h.b16 %v175
    %v538 = vunpack.c.l.b16 %v176
    %v539 = vunpack.c.h.b16 %v176
    %v540 = vunpack.c.l.b16 %v177
    %v541 = vunpack.c.h.b16 %v177
    %v542 = vunpack.c.l.b16 %v178
    %v543 = vunpack.c.h.b16 %v178
    %v544 = vunpack.c.l.b16 %v179
    %v545 = vunpack.c.h.b16 %v179
    %v546 = vunpack.c.l.b16 %v180
    %v547 = vunpack.c.h.b16 %v180
    %v548 = vunpack.c.l.b16 %v181
    %v549 = vunpack.c.h.b16 %v181
    %v550 = vunpack.c.l.b16 %v182
    %v551 = vunpack.c.h.b16 %v182
    %v552 = vunpack.c.l.b16 %v183
    %v553 = vunpack.c.h.b16 %v183
    %v554 = vunpack.c.l.b16 %v184
    %v555 = vunpack.c.h.b16 %v184
    %v556 = vunpack.c.l.b16 %v185
    %v557 = vunpack.c.h.b16 %v185
    %v558 = vunpack.c.l.b16 %v186
    %v559 = vunpack.c.h.b16 %v186
    %v560 = vunpack.c.l.b16 %v187
    %v561 = vunpack.c.h.b16 %v187
    %v562 = vunpack.c.l.b16 %v188
    %v563 = vunpack.c.h.b16 %v188
    %v564 = vunpack.c.l.b16 %v189
    %v565 = vunpack.c.h.b16 %v189
    %v566 = vunpack.c.l.b16 %v190
    %v567 = vunpack.c.h.b16 %v190
    %v568 = vunpack.c.l.b16 %v191
    %v569 = vunpack.c.h.b16 %v191
    %v570 = vunpack.c.l.b16 %v192
    %v571 = vunpack.c.h.b16 %v192
    %v572 = vunpack.c.l.b16 %v193
    %v573 = vunpack.c.h.b16 %v193
    %v574 = vunpack.c.l.b16 %v194
    %v575 = vunpack.c.h.b16 %v194
    %v576 = vunpack.c.l.b16 %v195
    %v577 = vunpack.c.h.b16 %v195
    %v578 = vunpack.c.l.b16 %v196
    %v579 = vunpack.c.h.b16 %v196
    %v580 = vunpack.c.l.b16 %v197
    %v581 = vunpack.c.h.b16 %v197
    %v582 = vpack.c.b16 %v328, %v326
    %v583 = vpack.c.b16 %v329, %v327
    %v584 = vpack.c.b16 %v332, %v330
    %v585 = vpack.c.b16 %v333, %v331
    %v586 = vpack.c.b16 %v336, %v334
    %v587 = vpack.c.b16 %v337, %v335
    %v588 = vpack.c.b16 %v340, %v338
    %v589 = vpack.c.b16 %v341, %v339
    %v590 = vpack.c.b16 %v344, %v342
    %v591 = vpack.c.b16 %v345, %v343
    %v592 = vpack.c.b16 %v348, %v346
    %v593 = vpack.c.b16 %v349, %v347
    %v594 = vpack.c.b16 %v352, %v350
    %v595 = vpack.c.b16 %v353, %v351
    %v596 = vpack.c.b16 %v356, %v354
    %v597 = vpack.c.b16 %v357, %v355
    %v598 = vpack.c.b16 %v360, %v358
    %v599 = vpack.c.b16 %v361, %v359
    %v600 = vpack.c.b16 %v364, %v362
    %v601 = vpack.c.b16 %v365, %v363
    %v602 = vpack.c.b16 %v368, %v366
    %v603 = vpack.c.b16 %v369, %v367
    %v604 = vpack.c.b16 %v372, %v370
    %v605 = vpack.c.b16 %v373, %v371
    %v606 = vpack.c.b16 %v376, %v374
    %v607 = vpack.c.b16 %v377, %v375
    %v608 = vpack.c.b16 %v380, %v378
    %v609 = vpack.c.b16 %v381, %v379
    %v610 = vpack.c.b16 %v384, %v382
    %v611 = vpack.c.b16 %v385, %v383
    %v612 = vpack.c.b16 %v388, %v386
    %v613 = vpack.c.b16 %v389, %v387
    %v614 = vpack.c.b16 %v392, %v390
    %v615 = vpack.c.b16 %v393, %v391
    %v616 = vpack.c.b16 %v396, %v394
    %v617 = vpack.c.b16 %v397, %v395
    %v618 = vpack.c.b16 %v400, %v398
    %v619 = vpack.c.b16 %v401, %v399
    %v620 = vpack.c.b16 %v404, %v402
    %v621 = vpack.c.b16 %v405, %v403
    %v622 = vpack.c.b16 %v408, %v406
    %v623 = vpack.c.b16 %v409, %v407
    %v624 = vpack.c.b16 %v412, %v410
    %v625 = vpack.c.b16 %v413, %v411
    %v626 = vpack.c.b16 %v416, %v414
    %v627 = vpack.c.b16 %v417, %v415
    %v628 = vpack.c.b16 %v420, %v418
    %v629 = vpack.c.b16 %v421, %v419
    %v630 = vpack.c.b16 %v424, %v422
    %v631 = vpack.c.b16 %v425, %v423
    %v632 = vpack.c.b16 %v428, %v426
    %v633 = vpack.c.b16 %v429, %v427
    %v634 = vpack.c.b16 %v432, %v430
    %v635 = vpack.c.b16 %v433, %v431
    %v636 = vpack.c.b16 %v436, %v434
    %v637 = vpack.c.b16 %v437, %v435
    %v638 = vpack.c.b16 %v440, %v438
    %v639 = vpack.c.b16 %v441, %v439
    %v640 = vpack.c.b16 %v444, %v442
    %v641 = vpack.c.b16 %v445, %v443
    %v642 = vpack.c.b16 %v448, %v446
    %v643 = vpack.c.b16 %v449, %v447
    %v644 = vpack.c.b16 %v452, %v450
    %v645 = vpack.c.b16 %v453, %v451
    %v646 = vpack.c.b16 %v456, %v454
    %v647 = vpack.c.b16 %v457, %v455
    %v648 = vpack.c.b16 %v460, %v458
    %v649 = vpack.c.b16 %v461, %v459
    %v650 = vpack.c.b16 %v464, %v462
    %v651 = vpack.c.b16 %v465, %v463
    %v652 = vpack.c.b16 %v468, %v466
    %v653 = vpack.c.b16 %v469, %v467
    %v654 = vpack.c.b16 %v472, %v470
    %v655 = vpack.c.b16 %v473, %v471
    %v656 = vpack.c.b16 %v476, %v474
    %v657 = vpack.c.b16 %v477, %v475
    %v658 = vpack.c.b16 %v480, %v478
    %v659 = vpack.c.b16 %v481, %v479
    %v660 = vpack.c.b16 %v484, %v482
    %v661 = vpack.c.b16 %v485, %v483
    %v662 = vpack.c.b16 %v488, %v486
    %v663 = vpack.c.b16 %v489, %v487
    %v664 = vpack.c.b16 %v492, %v490
    %v665 = vpack.c.b16 %v493, %v491
    %v666 = vpack.c.b16 %v496, %v494
    %v667 = vpack.c.b16 %v497, %v495
    %v668 = vpack.c.b16 %v500, %v498
    %v669 = vpack.c.b16 %v501, %v499
    %v670 = vpack.c.b16 %v504, %v502
    %v671 = vpack.c.b16 %v505, %v503
    %v672 = vpack.c.b16 %v508, %v506
    %v673 = vpack.c.b16 %v509, %v507
    %v674 = vpack.c.b16 %v512, %v510
    %v675 = vpack.c.b16 %v513, %v511
    %v676 = vpack.c.b16 %v516, %v514
    %v677 = vpack.c.b16 %v517, %v515
    %v678 = vpack.c.b16 %v520, %v518
    %v679 = vpack.c.b16 %v521, %v519
    %v680 = vpack.c.b16 %v524, %v522
    %v681 = vpack.c.b16 %v525, %v523
    %v682 = vpack.c.b16 %v528, %v526
    %v683 = vpack.c.b16 %v529, %v527
    %v684 = vpack.c.b16 %v532, %v530
    %v685 = vpack.c.b16 %v533, %v531
    %v686 = vpack.c.b16 %v536, %v534
    %v687 = vpack.c.b16 %v537, %v535
    %v688 = vpack.c.b16 %v540, %v538
    %v689 = vpack.c.b16 %v541, %v539
    %v690 = vpack.c.b16 %v544, %v542
    %v691 = vpack.c.b16 %v545, %v543
    %v692 = vpack.c.b16 %v548, %v546
    %v693 = vpack.c.b16 %v549, %v547
    %v694 = vpack.c.b16 %v552, %v550
    %v695 = vpack.c.b16 %v553, %v551
    %v696 = vpack.c.b16 %v556, %v554
    %v697 = vpack.c.b16 %v557, %v555
    %v698 = vpack.c.b16 %v560, %v558
    %v699 = vpack.c.b16 %v561, %v559
    %v700 = vpack.c.b16 %v564, %v562
    %v701 = vpack.c.b16 %v565, %v563
    %v702 = vpack.c.b16 %v568, %v566
    %v703 = vpack.c.b16 %v569, %v567
    %v704 = vpack.c.b16 %v572, %v570
    %v705 = vpack.c.b16 %v573, %v571
    %v706 = vpack.c.b16 %v576, %v574
    %v707 = vpack.c.b16 %v577, %v575
    %v708 = vpack.c.b16 %v580, %v578
    %v709 = vpack.c.b16 %v581, %v579
    %838 = vmatprep.subr.bf16.mxu0 %v583
    %839 = vmatpush1.bf16.msra.mxu0 %v582
    %840 = vmatprep.subr.bf16.mxu0 %v585
    %841 = vmatpush1.bf16.msra.mxu0 %v584
    %842 = vmatprep.subr.bf16.mxu0 %v587
    %843 = vmatpush1.bf16.msra.mxu0 %v586
    %844 = vmatprep.subr.bf16.mxu0 %v589
    %845 = vmatpush1.bf16.msra.mxu0 %v588
    %846 = vmatprep.subr.bf16.mxu0 %v591
    %847 = vmatpush1.bf16.msra.mxu0 %v590
    %848 = vmatprep.subr.bf16.mxu0 %v593
    %849 = vmatpush1.bf16.msra.mxu0 %v592
    %850 = vmatprep.subr.bf16.mxu0 %v595
    %851 = vmatpush1.bf16.msra.mxu0 %v594
    %852 = vmatprep.subr.bf16.mxu0 %v597
    %853 = vmatpush1.bf16.msra.mxu0 %v596
    %854 = vmatprep.subr.bf16.mxu0 %v599
    %855 = vmatpush1.bf16.msra.mxu0 %v598
    %856 = vmatprep.subr.bf16.mxu0 %v601
    %857 = vmatpush1.bf16.msra.mxu0 %v600
    %858 = vmatprep.subr.bf16.mxu0 %v603
    %859 = vmatpush1.bf16.msra.mxu0 %v602
    %860 = vmatprep.subr.bf16.mxu0 %v605
    %861 = vmatpush1.bf16.msra.mxu0 %v604
    %862 = vmatprep.subr.bf16.mxu0 %v607
    %863 = vmatpush1.bf16.msra.mxu0 %v606
    %864 = vmatprep.subr.bf16.mxu0 %v609
    %865 = vmatpush1.bf16.msra.mxu0 %v608
    %866 = vmatprep.subr.bf16.mxu0 %v611
    %867 = vmatpush1.bf16.msra.mxu0 %v610
    %868 = vmatprep.subr.bf16.mxu0 %v613
    %869 = vmatpush1.bf16.msra.mxu0 %v612
    %870 = vmatprep.mubr.bf16.mxu0 %v63
    %871 = vmatmul.mubr.bf16.gmra.mrb[0].mxu0 %v62
    %v872 = vpop.f32.mrb[0].mxu0
    %v873 = vadd.f32 0.0, %v872
    %v874 = vpop.f32.mrb[0].mxu0
    %v875 = vadd.f32 0.0, %v874
    %v876 = vpop.f32.mrb[0].mxu0
    %v877 = vadd.f32 0.0, %v876
    %v878 = vpop.f32.mrb[0].mxu0
    %v879 = vadd.f32 0.0, %v878
    %880 = vdwg.mxu0
    %881 = vmatprep.subr.bf16.mxu0 %v615
    %882 = vmatpush1.bf16.msra.mxu0 %v614
    %883 = vmatprep.subr.bf16.mxu0 %v617
    %884 = vmatpush1.bf16.msra.mxu0 %v616
    %885 = vmatprep.subr.bf16.mxu0 %v619
    %886 = vmatpush1.bf16.msra.mxu0 %v618
    %887 = vmatprep.subr.bf16.mxu0 %v621
    %888 = vmatpush1.bf16.msra.mxu0 %v620
    %889 = vmatprep.subr.bf16.mxu0 %v623
    %890 = vmatpush1.bf16.msra.mxu0 %v622
    %891 = vmatprep.subr.bf16.mxu0 %v625
    %892 = vmatpush1.bf16.msra.mxu0 %v624
    %893 = vmatprep.subr.bf16.mxu0 %v627
    %894 = vmatpush1.bf16.msra.mxu0 %v626
    %895 = vmatprep.subr.bf16.mxu0 %v629
    %896 = vmatpush1.bf16.msra.mxu0 %v628
    %897 = vmatprep.subr.bf16.mxu0 %v631
    %898 = vmatpush1.bf16.msra.mxu0 %v630
    %899 = vmatprep.subr.bf16.mxu0 %v633
    %900 = vmatpush1.bf16.msra.mxu0 %v632
    %901 = vmatprep.subr.bf16.mxu0 %v635
    %902 = vmatpush1.bf16.msra.mxu0 %v634
    %903 = vmatprep.subr.bf16.mxu0 %v637
    %904 = vmatpush1.bf16.msra.mxu0 %v636
    %905 = vmatprep.subr.bf16.mxu0 %v639
    %906 = vmatpush1.bf16.msra.mxu0 %v638
    %907 = vmatprep.subr.bf16.mxu0 %v641
    %908 = vmatpush1.bf16.msra.mxu0 %v640
    %909 = vmatprep.subr.bf16.mxu0 %v643
    %910 = vmatpush1.bf16.msra.mxu0 %v642
    %911 = vmatprep.subr.bf16.mxu0 %v645
    %912 = vmatpush1.bf16.msra.mxu0 %v644
    %913 = vmatprep.mubr.bf16.mxu0 %v65
    %914 = vmatmul.mubr.bf16.gmra.mrb[0].mxu0 %v64
    %v915 = vpop.f32.mrb[0].mxu0
    %v916 = vadd.f32 %v873, %v915
    %v917 = vpop.f32.mrb[0].mxu0
    %v918 = vadd.f32 %v875, %v917
    %v919 = vpop.f32.mrb[0].mxu0
    %v920 = vadd.f32 %v877, %v919
    %v921 = vpop.f32.mrb[0].mxu0
    %v922 = vadd.f32 %v879, %v921
    %923 = vdwg.mxu0
    %924 = vmatprep.subr.bf16.mxu0 %v647
    %925 = vmatpush1.bf16.msra.mxu0 %v646
    %926 = vmatprep.subr.bf16.mxu0 %v649
    %927 = vmatpush1.bf16.msra.mxu0 %v648
    %928 = vmatprep.subr.bf16.mxu0 %v651
    %929 = vmatpush1.bf16.msra.mxu0 %v650
    %930 = vmatprep.subr.bf16.mxu0 %v653
    %931 = vmatpush1.bf16.msra.mxu0 %v652
    %932 = vmatprep.subr.bf16.mxu0 %v655
    %933 = vmatpush1.bf16.msra.mxu0 %v654
    %934 = vmatprep.subr.bf16.mxu0 %v657
    %935 = vmatpush1.bf16.msra.mxu0 %v656
    %936 = vmatprep.subr.bf16.mxu0 %v659
    %937 = vmatpush1.bf16.msra.mxu0 %v658
    %938 = vmatprep.subr.bf16.mxu0 %v661
    %939 = vmatpush1.bf16.msra.mxu0 %v660
    %940 = vmatprep.subr.bf16.mxu0 %v663
    %941 = vmatpush1.bf16.msra.mxu0 %v662
    %942 = vmatprep.subr.bf16.mxu0 %v665
    %943 = vmatpush1.bf16.msra.mxu0 %v664
    %944 = vmatprep.subr.bf16.mxu0 %v667
    %945 = vmatpush1.bf16.msra.mxu0 %v666
    %946 = vmatprep.subr.bf16.mxu0 %v669
    %947 = vmatpush1.bf16.msra.mxu0 %v668
    %948 = vmatprep.subr.bf16.mxu0 %v671
    %949 = vmatpush1.bf16.msra.mxu0 %v670
    %950 = vmatprep.subr.bf16.mxu0 %v673
    %951 = vmatpush1.bf16.msra.mxu0 %v672
    %952 = vmatprep.subr.bf16.mxu0 %v675
    %953 = vmatpush1.bf16.msra.mxu0 %v674
    %954 = vmatprep.subr.bf16.mxu0 %v677
    %955 = vmatpush1.bf16.msra.mxu0 %v676
    %956 = vmatprep.mubr.bf16.mxu0 %v67
    %957 = vmatmul.mubr.bf16.gmra.mrb[0].mxu0 %v66
    %v958 = vpop.f32.mrb[0].mxu0
    %v959 = vadd.f32 %v916, %v958
    %v960 = vpop.f32.mrb[0].mxu0
    %v961 = vadd.f32 %v918, %v960
    %v962 = vpop.f32.mrb[0].mxu0
    %v963 = vadd.f32 %v920, %v962
    %v964 = vpop.f32.mrb[0].mxu0
    %v965 = vadd.f32 %v922, %v964
    %966 = vdwg.mxu0
    %967 = vmatprep.subr.bf16.mxu0 %v679
    %968 = vmatpush1.bf16.msra.mxu0 %v678
    %969 = vmatprep.subr.bf16.mxu0 %v681
    %970 = vmatpush1.bf16.msra.mxu0 %v680
    %971 = vmatprep.subr.bf16.mxu0 %v683
    %972 = vmatpush1.bf16.msra.mxu0 %v682
    %973 = vmatprep.subr.bf16.mxu0 %v685
    %974 = vmatpush1.bf16.msra.mxu0 %v684
    %975 = vmatprep.subr.bf16.mxu0 %v687
    %976 = vmatpush1.bf16.msra.mxu0 %v686
    %977 = vmatprep.subr.bf16.mxu0 %v689
    %978 = vmatpush1.bf16.msra.mxu0 %v688
    %979 = vmatprep.subr.bf16.mxu0 %v691
    %980 = vmatpush1.bf16.msra.mxu0 %v690
    %981 = vmatprep.subr.bf16.mxu0 %v693
    %982 = vmatpush1.bf16.msra.mxu0 %v692
    %983 = vmatprep.subr.bf16.mxu0 %v695
    %984 = vmatpush1.bf16.msra.mxu0 %v694
    %985 = vmatprep.subr.bf16.mxu0 %v697
    %986 = vmatpush1.bf16.msra.mxu0 %v696
    %987 = vmatprep.subr.bf16.mxu0 %v699
    %988 = vmatpush1.bf16.msra.mxu0 %v698
    %989 = vmatprep.subr.bf16.mxu0 %v701
    %990 = vmatpush1.bf16.msra.mxu0 %v700
    %991 = vmatprep.subr.bf16.mxu0 %v703
    %992 = vmatpush1.bf16.msra.mxu0 %v702
    %993 = vmatprep.subr.bf16.mxu0 %v705
    %994 = vmatpush1.bf16.msra.mxu0 %v704
    %995 = vmatprep.subr.bf16.mxu0 %v707
    %996 = vmatpush1.bf16.msra.mxu0 %v706
    %997 = vmatprep.subr.bf16.mxu0 %v709
    %998 = vmatpush1.bf16.msra.mxu0 %v708
    %999 = vmatprep.mubr.bf16.mxu0 %v69
    %1000 = vmatmul.mubr.bf16.gmra.mrb[0].mxu0 %v68
    %v1001 = vpop.f32.mrb[0].mxu0
    %v1002 = vadd.f32 %v959, %v1001
    %v1003 = vpop.f32.mrb[0].mxu0
    %v1004 = vadd.f32 %v961, %v1003
    %v1005 = vpop.f32.mrb[0].mxu0
    %v1006 = vadd.f32 %v963, %v1005
    %v1007 = vpop.f32.mrb[0].mxu0
    %v1008 = vadd.f32 %v965, %v1007
    %1009 = vdwg.mxu0
    %v1010 = vld [vmem:[%s2] sm:$0x1]
    %v1011 = vld [vmem:[%s3] sm:$0x1]
    %1014 = vrot.lane.b32.xlu0 %v1002, 96
    %v1015 = vpop.permute.xlu0 %1014
    %1016 = vrot.lane.b32.xlu0 %v1006, 96
    %v1017 = vpop.permute.xlu0 %1016
    %v1020 = vmax.f32 %v1002, %v1015
    %v1021 = vmax.f32 %v1006, %v1017
    %1022 = vrot.lane.b32.xlu0 %v1002, 64
    %v1023 = vpop.permute.xlu0 %1022
    %1024 = vrot.lane.b32.xlu0 %v1006, 64
    %v1025 = vpop.permute.xlu0 %1024
    %v1028 = vmax.f32 %v1020, %v1023
    %v1029 = vmax.f32 %v1021, %v1025
    %1030 = vrot.lane.b32.xlu0 %v1002, 32
    %v1031 = vpop.permute.xlu0 %1030
    %1032 = vrot.lane.b32.xlu0 %v1006, 32
    %v1033 = vpop.permute.xlu0 %1032
    %v1036 = vmax.f32 %v1028, %v1031
    %v1037 = vmax.f32 %v1029, %v1033
    %v1038 = vmax.f32 %v1036, %v1004
    %v1039 = vmax.f32 %v1037, %v1008
    %1042 = vrot.lane.b32.xlu0 %v1004, 96
    %v1043 = vpop.permute.xlu0 %1042
    %1044 = vrot.lane.b32.xlu0 %v1008, 96
    %v1045 = vpop.permute.xlu0 %1044
    %v1048 = vmax.f32 %v1038, %v1043
    %v1049 = vmax.f32 %v1039, %v1045
    %1050 = vrot.lane.b32.xlu0 %v1004, 64
    %v1051 = vpop.permute.xlu0 %1050
    %1052 = vrot.lane.b32.xlu0 %v1008, 64
    %v1053 = vpop.permute.xlu0 %1052
    %v1056 = vmax.f32 %v1048, %v1051
    %v1057 = vmax.f32 %v1049, %v1053
    %1058 = vrot.lane.b32.xlu0 %v1004, 32
    %v1059 = vpop.permute.xlu0 %1058
    %1060 = vrot.lane.b32.xlu0 %v1008, 32
    %v1061 = vpop.permute.xlu0 %1060
    %v1064 = vmax.f32 %v1056, %v1059
    %v1065 = vmax.f32 %v1057, %v1061
    %v1067 = vlaneseq
    %v1068 = vshrl.u32 %v1067, 7
    %v1069 = vsub.s32 0, %v1068
    %v1070 = vrot.slane %v1010, %v1069
    %v1072 = vmul.f32 %v1064, %v1070
    %v1073 = vmul.f32 %v1065, %v1070
    %v1075 = vlaneseq
    %v1076 = vshrl.u32 %v1075, 7
    %v1077 = vsub.s32 0, %v1076
    %v1078 = vrot.slane %v1011, %v1077
    %v1080 = vadd.f32 %v1072, %v1078
    %v1081 = vadd.f32 %v1073, %v1078
    %vm1082 = vcmask 261120
    %1083 = vst.msk [vmem:[#allocation7] sm:$0xff] %vm1082, %v1080
    %1084 = vst.msk [vmem:[#allocation7 + $0x8] sm:$0xff] %vm1082, %v1081
    // Predicated region
    $region26: #{tpu_custom_call.1} parent=1 // pred_check
      _
    $region27: #{tpu_custom_call.1} parent=1 // pred_check_branch
      %1086 = sbr.rel (0) target = $region29
    $region28: #{tpu_custom_call.1} parent=1 // pred_region
      %s1088 = ssub.s32 256, 256
      %1089 = vsyncadd [#allocation4], %s1088
      %s1090 = sshll.u32 [#allocation7], 4
      %s1091 = int_to_ptr.vmem [resolvable:$true] %s1090
      %1096 = dma.vmem_to_hbm [thread:$0]  %s1091, 256, %s4, [#allocation4], 128, 128, 8
    $region29: #{tpu_custom_call.1} parent=1 // pred_fallthru
      _
    // Predicated region
    $region30: #{tpu_custom_call.1} parent=1 // pred_check
      _
    $region31: #{tpu_custom_call.1} parent=1 // pred_check_branch
      %1098 = sbr.rel (0) target = $region33
    $region32: #{tpu_custom_call.1} parent=1 // pred_region
      %1099 = dma.done [#allocation4], 256
    $region33: #{tpu_custom_call.1} parent=1 // pred_fallthru
      _
    %1100 = vsyncpa [#allocation3], 1
    %1101 = vsyncpa [#allocation6], 1
    %1102 = vsyncpa [#allocation4], 1

</llo_original>
